<compile_context>
chip_gen: v6e
topology: v6e:2x2x1
jax: 0.10.0
libtpu: 0.0.40
codegen_flags: <defaults>
</compile_context>

<pallas_src>
import functools

import jax
import jax.numpy as jnp
from jax.experimental import pallas as pl
from jax.experimental.pallas import tpu as pltpu

_LANES = 128
_PAD_LOGIT = -1e4  # exp(-|pad|) underflows to 0; hinge error 1-1e4 sorts last.


# ---------------------------------------------------------------------------
# Kernel A: fused streaming pass over (logit, truth)
# ---------------------------------------------------------------------------
def _bce_errors_kernel(logit_ref, truth_ref, err_ref, bce_ref, cnt_ref):
    c = pl.program_id(1)

    @pl.when(c == 0)
    def _():
        bce_ref[...] = jnp.zeros_like(bce_ref)
        cnt_ref[...] = jnp.zeros_like(cnt_ref)

    x = logit_ref[0].astype(jnp.float32)      # (bk, 128)
    y = truth_ref[0].astype(jnp.float32)      # (bk, 128)

    # Lovasz hinge errors: 1 - logit * sign,  sign = 2*truth - 1.
    err_ref[0] = 1.0 - x * (2.0 * y - 1.0)

    # Numerically stable BCE-with-logits: max(x,0) - x*y + log(1 + exp(-|x|)).
    bce = jnp.maximum(x, 0.0) - x * y + jnp.log(1.0 + jnp.exp(-jnp.abs(x)))

    # Lane-shaped accumulators resident in the output blocks across the chunk axis;
    # the final cross-lane reduction is done once outside the kernel.
    bce_ref[0] += jnp.sum(bce, axis=0, keepdims=True)      # (1, 128)
    cnt_ref[0] += jnp.sum(y, axis=0, keepdims=True)        # (1, 128)


# ---------------------------------------------------------------------------
# Kernel B: per-image Lovasz hinge reduction over sorted (errors, labels)
# ---------------------------------------------------------------------------
def _lovasz_kernel(gts_ref, err_ref, gt_ref, out_ref, carry_ref):
    b = pl.program_id(0)
    c = pl.program_id(1)

    @pl.when(c == 0)
    def _():
        out_ref[...] = jnp.zeros_like(out_ref)
        carry_ref[...] = jnp.zeros_like(carry_ref)

    e = err_ref[0]                            # (bk, 128) errors, descending flat order
    g = gt_ref[0].astype(jnp.float32)         # (bk, 128) co-sorted 0/1 labels
    bk = e.shape[0]

    # --- flat (row-major) inclusive cumsum of g within the tile, via MXU ---
    k = jax.lax.broadcasted_iota(jnp.int32, (_LANES, _LANES), 0)
    j = jax.lax.broadcasted_iota(jnp.int32, (_LANES, _LANES), 1)
    upper = (k <= j).astype(jnp.float32)                      # U[k, j] = k <= j
    ones = jnp.ones((_LANES, _LANES), jnp.float32)

    r_i = jax.lax.broadcasted_iota(jnp.int32, (bk, bk), 0)
    s_i = jax.lax.broadcasted_iota(jnp.int32, (bk, bk), 1)
    lower = (r_i > s_i).astype(jnp.float32)                   # strictly lower ones

    lane_cs = jnp.dot(g, upper, preferred_element_type=jnp.float32)    # within-row cumsum
    row_tot = jnp.dot(g, ones, preferred_element_type=jnp.float32)     # row sums (lane bcast)
    row_pre = jnp.dot(lower, row_tot, preferred_element_type=jnp.float32)  # excl. row prefix

    carry = carry_ref[...]                                    # (1, 1) prior-chunk count
    cg = lane_cs + row_pre + carry                            # inclusive cumsum of gt_sorted

    # Global 0-based flat position within the (padded) image.
    ridx = jax.lax.broadcasted_iota(jnp.int32, (bk, _LANES), 0)
    lidx = jax.lax.broadcasted_iota(jnp.int32, (bk, _LANES), 1)
    idx = ridx * _LANES + lidx + c * (bk * _LANES)
    idx_f = idx.astype(jnp.float32)

    gts = gts_ref[b].astype(jnp.float32)                      # total foreground count

    # Lovasz-extension gradient, elementwise:
    #   jaccard(i)   from inclusive cumsum cg and count (i+1)
    #   jaccard(i-1) from cg - g and count i        (defined as 0 at i == 0)
    jac = 1.0 - (gts - cg) / (gts + (idx_f + 1.0) - cg)
    cg_prev = cg - g
    jac_prev = jnp.where(idx == 0, 0.0,
                         1.0 - (gts - cg_prev) / (gts + idx_f - cg_prev))
    grad = jac - jac_prev

    contrib = jnp.maximum(e, 0.0) * grad
    out_ref[0] += jnp.sum(contrib, axis=0, keepdims=True)     # (1, 128)

    carry_ref[...] = carry + jnp.sum(g)


# ---------------------------------------------------------------------------
# Wrapper
# ---------------------------------------------------------------------------
@functools.partial(jax.jit, static_argnames=("per_image", "block_rows"))
def bce_lovasz_loss(logit, truth, per_image=True, block_rows=512):
    """Pallas equivalent of BCE_Lovasz().forward(logit, truth). Returns f32 scalar."""
    assert logit.shape == truth.shape
    n_valid = logit.size                      # BCE mean denominator (real elements)

    b_eff = logit.shape[0] if per_image else 1
    x = logit.reshape(b_eff, -1)
    y = truth.reshape(b_eff, -1)
    p = x.shape[1]

    r = pl.cdiv(p, _LANES)
    if r <= block_rows:
        bk, r_pad = r, r
    else:
        bk = block_rows
        r_pad = pl.cdiv(r, bk) * bk
    p_pad = r_pad * _LANES
    pad = p_pad - p
    if pad:   # padding contributes exactly 0 everywhere; no in-kernel masking needed.
        x = jnp.pad(x, ((0, 0), (0, pad)), constant_values=_PAD_LOGIT)
        y = jnp.pad(y, ((0, 0), (0, pad)))
    x3 = x.reshape(b_eff, r_pad, _LANES)
    y3 = y.reshape(b_eff, r_pad, _LANES)

    n_chunks = r_pad // bk
    grid = (b_eff, n_chunks)
    cparams = pltpu.CompilerParams(dimension_semantics=("parallel", "arbitrary"))

    # --- Kernel A: errors + BCE / foreground-count partial sums -------------
    errors, bce_ls, cnt_ls = pl.pallas_call(
        _bce_errors_kernel,
        out_shape=(
            jax.ShapeDtypeStruct((b_eff, r_pad, _LANES), jnp.float32),
            jax.ShapeDtypeStruct((b_eff, 1, _LANES), jnp.float32),
            jax.ShapeDtypeStruct((b_eff, 1, _LANES), jnp.float32),
        ),
        grid_spec=pltpu.PrefetchScalarGridSpec(
            num_scalar_prefetch=0,
            grid=grid,
            in_specs=[pl.BlockSpec((1, bk, _LANES), lambda b, c: (b, c, 0)),
                      pl.BlockSpec((1, bk, _LANES), lambda b, c: (b, c, 0))],
            out_specs=(pl.BlockSpec((1, bk, _LANES), lambda b, c: (b, c, 0)),
                       pl.BlockSpec((1, 1, _LANES), lambda b, c: (b, 0, 0)),
                       pl.BlockSpec((1, 1, _LANES), lambda b, c: (b, 0, 0))),
        ),
        compiler_params=cparams,
    )(x3, y3)

    bce = jnp.sum(bce_ls) / jnp.float32(n_valid)
    gts = jnp.sum(cnt_ls, axis=(1, 2))                        # (b_eff,) foreground counts
    gts_i32 = jnp.round(gts).astype(jnp.int32)

    # --- per-image descending sort of errors with co-sorted labels ----------
    # TODO(synk): the sort (torch.sort) has no clean Pallas TPU equivalent; it is
    # done with jax.lax.sort_key_val and only the surrounding math is in kernels.
    neg_err_sorted, gt_sorted = jax.lax.sort_key_val(
        -errors.reshape(b_eff, p_pad), y, dimension=-1)
    err_sorted = (-neg_err_sorted).reshape(b_eff, r_pad, _LANES)
    gt_sorted = gt_sorted.reshape(b_eff, r_pad, _LANES)

    # --- Kernel B: Lovasz hinge per image ------------------------------------
    lov_ls = pl.pallas_call(
        _lovasz_kernel,
        out_shape=jax.ShapeDtypeStruct((b_eff, 1, _LANES), jnp.float32),
        grid_spec=pltpu.PrefetchScalarGridSpec(
            num_scalar_prefetch=1,
            grid=grid,
            in_specs=[pl.BlockSpec((1, bk, _LANES), lambda b, c, gts_s: (b, c, 0)),
                      pl.BlockSpec((1, bk, _LANES), lambda b, c, gts_s: (b, c, 0))],
            out_specs=pl.BlockSpec((1, 1, _LANES), lambda b, c, gts_s: (b, 0, 0)),
            scratch_shapes=[pltpu.VMEM((1, 1), jnp.float32)],   # cumsum carry per image
        ),
        compiler_params=cparams,
    )(gts_i32, err_sorted, gt_sorted)

    lovasz = jnp.mean(jnp.sum(lov_ls, axis=(1, 2)))
    return bce + lovasz


# ---------------------------------------------------------------------------
# Pure-JAX reference (mirrors the PyTorch binary_xloss + lovasz_hinge code)
# ---------------------------------------------------------------------------
def _reference_bce_lovasz(logit, truth, per_image=True):
    logit = logit.astype(jnp.float32)
    truth = truth.astype(jnp.float32)

    xf = logit.reshape(-1)
    yf = truth.reshape(-1)
    bce = jnp.mean(jnp.maximum(xf, 0.0) - xf * yf + jnp.log1p(jnp.exp(-jnp.abs(xf))))

    def lovasz_flat(lg, lb):
        signs = 2.0 * lb - 1.0
        errors = 1.0 - lg * signs
        order = jnp.argsort(-errors)
        errors_sorted = errors[order]
        gt_sorted = lb[order]
        gts = jnp.sum(gt_sorted)
        inter = gts - jnp.cumsum(gt_sorted)
        union = gts + jnp.cumsum(1.0 - gt_sorted)
        jac = 1.0 - inter / union
        grad = jnp.concatenate([jac[:1], jac[1:] - jac[:-1]])
        return jnp.dot(jax.nn.relu(errors_sorted), grad)

    if per_image:
        losses = [lovasz_flat(logit[i].reshape(-1), truth[i].reshape(-1))
                  for i in range(logit.shape[0])]
        lov = jnp.mean(jnp.stack(losses))
    else:
        lov = lovasz_flat(logit.reshape(-1), truth.reshape(-1))
    return bce + lov


if __name__ == "__main__":
    key = jax.random.PRNGKey(0)
    k1, k2, k3, k4 = jax.random.split(key, 4)

    # NCHW inputs, as the PyTorch module would receive from a segmentation head.
    B, C, H, W = 2, 4, 16, 16
    logit = jax.random.normal(k1, (B, C, H, W), dtype=jnp.float32) * 2.0
    truth = jax.random.bernoulli(k2, 0.3, (B, C, H, W)).astype(jnp.float32)

    loss = jax.block_until_ready(bce_lovasz_loss(logit, truth, per_image=True))
    ref = jax.block_until_ready(_reference_bce_lovasz(logit, truth, per_image=True))
    assert jnp.allclose(loss, ref, atol=1e-4, rtol=1e-4), (loss, ref)

    # Ragged spatial size exercises the negative-logit padding path.
    logit2 = jax.random.normal(k3, (B, C, 15, 15), dtype=jnp.float32) * 2.0
    truth2 = jax.random.bernoulli(k4, 0.3, (B, C, 15, 15)).astype(jnp.float32)
    loss2 = jax.block_until_ready(bce_lovasz_loss(logit2, truth2, per_image=True))
    ref2 = jax.block_until_ready(_reference_bce_lovasz(logit2, truth2, per_image=True))
    assert jnp.allclose(loss2, ref2, atol=1e-4, rtol=1e-4), (loss2, ref2)

    # per_image=False variant of the module.
    loss3 = jax.block_until_ready(bce_lovasz_loss(logit, truth, per_image=False))
    ref3 = jax.block_until_ready(_reference_bce_lovasz(logit, truth, per_image=False))
    assert jnp.allclose(loss3, ref3, atol=1e-4, rtol=1e-4), (loss3, ref3)

    print("KERNEL_OK")
</pallas_src>

<mosaic_0001>
module attributes {stable_mosaic.version = 11 : i64} {
  func.func @_bce_errors_kernel(%arg0: i32, %arg1: i32, %arg2: memref<1x8x128xf32, #tpu.memory_space<vmem>>, %arg3: memref<1x8x128xf32, #tpu.memory_space<vmem>>, %arg4: memref<1x8x128xf32, #tpu.memory_space<vmem>>, %arg5: memref<1x1x128xf32, #tpu.memory_space<vmem>>, %arg6: memref<1x1x128xf32, #tpu.memory_space<vmem>>) attributes {dimension_semantics = [#tpu.dimension_semantics<parallel>, #tpu.dimension_semantics<arbitrary>], iteration_bounds = array<i64: 2, 1>, scalar_prefetch = 0 : i64, scratch_operands = 0 : i64, tpu.core_type = #tpu.core_type<tc>, window_params = [{transform_indices = @transform_0, window_bounds = array<i64: 1, 8, 128>}, {transform_indices = @transform_1, window_bounds = array<i64: 1, 8, 128>}, {transform_indices = @transform_2, window_bounds = array<i64: 1, 8, 128>}, {transform_indices = @transform_3, window_bounds = array<i64: 1, 1, 128>}, {transform_indices = @transform_4, window_bounds = array<i64: 1, 1, 128>}]} {
    %c0_i32 = arith.constant 0 : i32
    %0 = arith.cmpi eq, %arg1, %c0_i32 : i32
    %1 = arith.extui %0 : i1 to i32
    %c0_i32_0 = arith.constant 0 : i32
    %2 = arith.cmpi ne, %1, %c0_i32_0 : i32
    scf.if %2 {
      %cst_28 = arith.constant 0.000000e+00 : f32
      %45 = vector.broadcast %cst_28 : f32 to vector<1x1x128xf32>
      %c0_29 = arith.constant 0 : index
      %c0_30 = arith.constant 0 : index
      %c0_31 = arith.constant 0 : index
      %46 = vector.load %arg5[%c0_29, %c0_30, %c0_31] : memref<1x1x128xf32, #tpu.memory_space<vmem>>, vector<1x1x128xf32>
      tpu.vector_store %arg5[%c0_29, %c0_30, %c0_31], %45 {strides = array<i32>} : memref<1x1x128xf32, #tpu.memory_space<vmem>>, vector<1x1x128xf32>,
      %cst_32 = arith.constant 0.000000e+00 : f32
      %47 = vector.broadcast %cst_32 : f32 to vector<1x1x128xf32>
      %c0_33 = arith.constant 0 : index
      %c0_34 = arith.constant 0 : index
      %c0_35 = arith.constant 0 : index
      %48 = vector.load %arg6[%c0_33, %c0_34, %c0_35] : memref<1x1x128xf32, #tpu.memory_space<vmem>>, vector<1x1x128xf32>
      tpu.vector_store %arg6[%c0_33, %c0_34, %c0_35], %47 {strides = array<i32>} : memref<1x1x128xf32, #tpu.memory_space<vmem>>, vector<1x1x128xf32>,
    } else {
    }
    %c0 = arith.constant 0 : index
    %c0_1 = arith.constant 0 : index
    %c0_2 = arith.constant 0 : index
    %3 = vector.load %arg2[%c0, %c0_1, %c0_2] : memref<1x8x128xf32, #tpu.memory_space<vmem>>, vector<1x8x128xf32>
    %4 = vector.shape_cast %3 : vector<1x8x128xf32> to vector<8x128xf32>
    %c0_3 = arith.constant 0 : index
    %c0_4 = arith.constant 0 : index
    %c0_5 = arith.constant 0 : index
    %5 = vector.load %arg3[%c0_3, %c0_4, %c0_5] : memref<1x8x128xf32, #tpu.memory_space<vmem>>, vector<1x8x128xf32>
    %6 = vector.shape_cast %5 : vector<1x8x128xf32> to vector<8x128xf32>
    %cst = arith.constant 2.000000e+00 : f32
    %7 = vector.broadcast %cst : f32 to vector<8x128xf32>
    %8 = arith.mulf %7, %6 : vector<8x128xf32>
    %cst_6 = arith.constant 1.000000e+00 : f32
    %9 = vector.broadcast %cst_6 : f32 to vector<8x128xf32>
    %10 = arith.subf %8, %9 : vector<8x128xf32>
    %11 = arith.mulf %4, %10 : vector<8x128xf32>
    %cst_7 = arith.constant 1.000000e+00 : f32
    %12 = vector.broadcast %cst_7 : f32 to vector<8x128xf32>
    %13 = arith.subf %12, %11 : vector<8x128xf32>
    %c0_8 = arith.constant 0 : index
    %c0_9 = arith.constant 0 : index
    %c0_10 = arith.constant 0 : index
    %14 = vector.load %arg4[%c0_8, %c0_9, %c0_10] : memref<1x8x128xf32, #tpu.memory_space<vmem>>, vector<1x8x128xf32>
    %15 = vector.shape_cast %14 : vector<1x8x128xf32> to vector<8x128xf32>
    %16 = vector.shape_cast %13 : vector<8x128xf32> to vector<1x8x128xf32>
    tpu.vector_store %arg4[%c0_8, %c0_9, %c0_10], %16 {strides = array<i32>} : memref<1x8x128xf32, #tpu.memory_space<vmem>>, vector<1x8x128xf32>,
    %cst_11 = arith.constant 0.000000e+00 : f32
    %17 = vector.broadcast %cst_11 : f32 to vector<8x128xf32>
    %18 = arith.maximumf %4, %17 : vector<8x128xf32>
    %19 = arith.mulf %4, %6 : vector<8x128xf32>
    %20 = arith.subf %18, %19 : vector<8x128xf32>
    %21 = math.absf %4 : vector<8x128xf32>
    %cst_12 = arith.constant 0.000000e+00 : f32
    %22 = vector.broadcast %cst_12 : f32 to vector<8x128xf32>
    %23 = arith.subf %22, %21 : vector<8x128xf32>
    %24 = math.exp %23 : vector<8x128xf32>
    %cst_13 = arith.constant 1.000000e+00 : f32
    %25 = vector.broadcast %cst_13 : f32 to vector<8x128xf32>
    %26 = arith.addf %25, %24 : vector<8x128xf32>
    %27 = math.log %26 : vector<8x128xf32>
    %28 = arith.addf %20, %27 : vector<8x128xf32>
    %c0_14 = arith.constant 0 : index
    %c0_15 = arith.constant 0 : index
    %c0_16 = arith.constant 0 : index
    %29 = vector.load %arg5[%c0_14, %c0_15, %c0_16] : memref<1x1x128xf32, #tpu.memory_space<vmem>>, vector<1x1x128xf32>
    %30 = vector.shape_cast %29 : vector<1x1x128xf32> to vector<1x128xf32>
    %cst_17 = arith.constant dense<0.000000e+00> : vector<128xf32>
    %31 = vector.multi_reduction <add>, %28, %cst_17 [0] : vector<8x128xf32> to vector<128xf32>
    %32 = vector.shape_cast %31 : vector<128xf32> to vector<1x128xf32>
    %33 = arith.addf %30, %32 : vector<1x128xf32>
    %c0_18 = arith.constant 0 : index
    %c0_19 = arith.constant 0 : index
    %c0_20 = arith.constant 0 : index
    %34 = vector.load %arg5[%c0_18, %c0_19, %c0_20] : memref<1x1x128xf32, #tpu.memory_space<vmem>>, vector<1x1x128xf32>
    %35 = vector.shape_cast %34 : vector<1x1x128xf32> to vector<1x128xf32>
    %36 = vector.shape_cast %33 : vector<1x128xf32> to vector<1x1x128xf32>
    tpu.vector_store %arg5[%c0_18, %c0_19, %c0_20], %36 {strides = array<i32>} : memref<1x1x128xf32, #tpu.memory_space<vmem>>, vector<1x1x128xf32>,
    %c0_21 = arith.constant 0 : index
    %c0_22 = arith.constant 0 : index
    %c0_23 = arith.constant 0 : index
    %37 = vector.load %arg6[%c0_21, %c0_22, %c0_23] : memref<1x1x128xf32, #tpu.memory_space<vmem>>, vector<1x1x128xf32>
    %38 = vector.shape_cast %37 : vector<1x1x128xf32> to vector<1x128xf32>
    %cst_24 = arith.constant dense<0.000000e+00> : vector<128xf32>
    %39 = vector.multi_reduction <add>, %6, %cst_24 [0] : vector<8x128xf32> to vector<128xf32>
    %40 = vector.shape_cast %39 : vector<128xf32> to vector<1x128xf32>
    %41 = arith.addf %38, %40 : vector<1x128xf32>
    %c0_25 = arith.constant 0 : index
    %c0_26 = arith.constant 0 : index
    %c0_27 = arith.constant 0 : index
    %42 = vector.load %arg6[%c0_25, %c0_26, %c0_27] : memref<1x1x128xf32, #tpu.memory_space<vmem>>, vector<1x1x128xf32>
    %43 = vector.shape_cast %42 : vector<1x1x128xf32> to vector<1x128xf32>
    %44 = vector.shape_cast %41 : vector<1x128xf32> to vector<1x1x128xf32>
    tpu.vector_store %arg6[%c0_25, %c0_26, %c0_27], %44 {strides = array<i32>} : memref<1x1x128xf32, #tpu.memory_space<vmem>>, vector<1x1x128xf32>,
    return
  }
  func.func @transform_0(%arg0: i32, %arg1: i32) -> (i32, i32, i32) {
    %c0_i32 = arith.constant 0 : i32
    %c0_i32_0 = arith.constant 0 : i32
    return %arg0, %arg1, %c0_i32 : i32, i32, i32
  }
  func.func @transform_1(%arg0: i32, %arg1: i32) -> (i32, i32, i32) {
    %c0_i32 = arith.constant 0 : i32
    %c0_i32_0 = arith.constant 0 : i32
    return %arg0, %arg1, %c0_i32 : i32, i32, i32
  }
  func.func @transform_2(%arg0: i32, %arg1: i32) -> (i32, i32, i32) {
    %c0_i32 = arith.constant 0 : i32
    %c0_i32_0 = arith.constant 0 : i32
    return %arg0, %arg1, %c0_i32 : i32, i32, i32
  }
  func.func @transform_3(%arg0: i32, %arg1: i32) -> (i32, i32, i32) {
    %c0_i32 = arith.constant 0 : i32
    %c0_i32_0 = arith.constant 0 : i32
    %c0_i32_1 = arith.constant 0 : i32
    return %arg0, %c0_i32, %c0_i32_0 : i32, i32, i32
  }
  func.func @transform_4(%arg0: i32, %arg1: i32) -> (i32, i32, i32) {
    %c0_i32 = arith.constant 0 : i32
    %c0_i32_0 = arith.constant 0 : i32
    %c0_i32_1 = arith.constant 0 : i32
    return %arg0, %c0_i32, %c0_i32_0 : i32, i32, i32
  }
}

module attributes {stable_mosaic.version = 11 : i64} {
  func.func @_lovasz_kernel(%arg0: i32, %arg1: i32, %arg2: memref<2xi32, #tpu.memory_space<smem>>, %arg3: memref<1x8x128xf32, #tpu.memory_space<vmem>>, %arg4: memref<1x8x128xf32, #tpu.memory_space<vmem>>, %arg5: memref<1x1x128xf32, #tpu.memory_space<vmem>>, %arg6: memref<1x1xf32, #tpu.memory_space<vmem>>) attributes {dimension_semantics = [#tpu.dimension_semantics<parallel>, #tpu.dimension_semantics<arbitrary>], iteration_bounds = array<i64: 2, 1>, scalar_prefetch = 1 : i64, scratch_operands = 1 : i64, tpu.core_type = #tpu.core_type<tc>, window_params = [{transform_indices = @transform_0, window_bounds = array<i64: 1, 8, 128>}, {transform_indices = @transform_1, window_bounds = array<i64: 1, 8, 128>}, {transform_indices = @transform_2, window_bounds = array<i64: 1, 1, 128>}]} {
    %c0_i32 = arith.constant 0 : i32
    %0 = arith.cmpi eq, %arg1, %c0_i32 : i32
    %1 = arith.extui %0 : i1 to i32
    %c0_i32_0 = arith.constant 0 : i32
    %2 = arith.cmpi ne, %1, %c0_i32_0 : i32
    scf.if %2 {
      %cst_27 = arith.constant 0.000000e+00 : f32
      %79 = vector.broadcast %cst_27 : f32 to vector<1x1x128xf32>
      %c0_28 = arith.constant 0 : index
      %c0_29 = arith.constant 0 : index
      %c0_30 = arith.constant 0 : index
      %80 = vector.load %arg5[%c0_28, %c0_29, %c0_30] : memref<1x1x128xf32, #tpu.memory_space<vmem>>, vector<1x1x128xf32>
      tpu.vector_store %arg5[%c0_28, %c0_29, %c0_30], %79 {strides = array<i32>} : memref<1x1x128xf32, #tpu.memory_space<vmem>>, vector<1x1x128xf32>,
      %cst_31 = arith.constant 0.000000e+00 : f32
      %81 = vector.broadcast %cst_31 : f32 to vector<1x1xf32>
      %c0_32 = arith.constant 0 : index
      %c0_33 = arith.constant 0 : index
      %82 = vector.load %arg6[%c0_32, %c0_33] : memref<1x1xf32, #tpu.memory_space<vmem>>, vector<1x1xf32>
      tpu.vector_store %arg6[%c0_32, %c0_33], %81 {strides = array<i32>} : memref<1x1xf32, #tpu.memory_space<vmem>>, vector<1x1xf32>,
    } else {
    }
    %c0 = arith.constant 0 : index
    %c0_1 = arith.constant 0 : index
    %c0_2 = arith.constant 0 : index
    %3 = vector.load %arg3[%c0, %c0_1, %c0_2] : memref<1x8x128xf32, #tpu.memory_space<vmem>>, vector<1x8x128xf32>
    %4 = vector.shape_cast %3 : vector<1x8x128xf32> to vector<8x128xf32>
    %c0_3 = arith.constant 0 : index
    %c0_4 = arith.constant 0 : index
    %c0_5 = arith.constant 0 : index
    %5 = vector.load %arg4[%c0_3, %c0_4, %c0_5] : memref<1x8x128xf32, #tpu.memory_space<vmem>>, vector<1x8x128xf32>
    %6 = vector.shape_cast %5 : vector<1x8x128xf32> to vector<8x128xf32>
    %7 = tpu.iota {dimensions = array<i32: 0>} : vector<128x128xi32>
    %8 = tpu.iota {dimensions = array<i32: 1>} : vector<128x128xi32>
    %9 = arith.cmpi sle, %7, %8 : vector<128x128xi32>
    %10 = arith.extui %9 : vector<128x128xi1> to vector<128x128xi32>
    %11 = arith.sitofp %10 : vector<128x128xi32> to vector<128x128xf32>
    %cst = arith.constant 1.000000e+00 : f32
    %12 = vector.broadcast %cst : f32 to vector<128x128xf32>
    %13 = tpu.iota {dimensions = array<i32: 0>} : vector<8x8xi32>
    %14 = tpu.iota {dimensions = array<i32: 1>} : vector<8x8xi32>
    %15 = arith.cmpi sgt, %13, %14 : vector<8x8xi32>
    %16 = arith.extui %15 : vector<8x8xi1> to vector<8x8xi32>
    %17 = arith.sitofp %16 : vector<8x8xi32> to vector<8x8xf32>
    %cst_6 = arith.constant dense<0.000000e+00> : vector<8x128xf32>
    %18 = tpu.matmul %6, %11, %cst_6 {dimension_numbers = #tpu.dot_dimension_numbers<[1], [0], [0], [1], [0, 0, 1, 1], [], []>} : vector<8x128xf32>, vector<128x128xf32>, vector<8x128xf32> -> vector<8x128xf32>
    %cst_7 = arith.constant dense<0.000000e+00> : vector<8x128xf32>
    %19 = tpu.matmul %6, %12, %cst_7 {dimension_numbers = #tpu.dot_dimension_numbers<[1], [0], [0], [1], [0, 0, 1, 1], [], []>} : vector<8x128xf32>, vector<128x128xf32>, vector<8x128xf32> -> vector<8x128xf32>
    %cst_8 = arith.constant dense<0.000000e+00> : vector<8x128xf32>
    %20 = tpu.matmul %17, %19, %cst_8 {dimension_numbers = #tpu.dot_dimension_numbers<[1], [0], [0], [1], [0, 0, 1, 1], [], []>} : vector<8x8xf32>, vector<8x128xf32>, vector<8x128xf32> -> vector<8x128xf32>
    %c0_9 = arith.constant 0 : index
    %c0_10 = arith.constant 0 : index
    %21 = vector.load %arg6[%c0_9, %c0_10] : memref<1x1xf32, #tpu.memory_space<vmem>>, vector<1x1xf32>
    %22 = arith.addf %18, %20 : vector<8x128xf32>
    %23 = vector.broadcast %21 : vector<1x1xf32> to vector<8x128xf32>
    %24 = arith.addf %22, %23 : vector<8x128xf32>
    %25 = tpu.iota {dimensions = array<i32: 0>} : vector<8x128xi32>
    %26 = tpu.iota {dimensions = array<i32: 1>} : vector<8x128xi32>
    %c128_i32 = arith.constant 128 : i32
    %27 = vector.broadcast %c128_i32 : i32 to vector<8x128xi32>
    %28 = arith.muli %25, %27 : vector<8x128xi32>
    %29 = arith.addi %28, %26 : vector<8x128xi32>
    %c1024_i32 = arith.constant 1024 : i32
    %30 = arith.muli %arg1, %c1024_i32 : i32
    %31 = vector.broadcast %30 : i32 to vector<8x128xi32>
    %32 = arith.addi %29, %31 : vector<8x128xi32>
    %33 = arith.sitofp %32 : vector<8x128xi32> to vector<8x128xf32>
    %34 = arith.index_cast %arg0 : i32 to index
    %35 = memref.load %arg2[%34] : memref<2xi32, #tpu.memory_space<smem>>
    %36 = arith.sitofp %35 : i32 to f32
    %37 = vector.broadcast %36 : f32 to vector<8x128xf32>
    %38 = arith.subf %37, %24 : vector<8x128xf32>
    %cst_11 = arith.constant 1.000000e+00 : f32
    %39 = vector.broadcast %cst_11 : f32 to vector<8x128xf32>
    %40 = arith.addf %33, %39 : vector<8x128xf32>
    %41 = vector.broadcast %36 : f32 to vector<8x128xf32>
    %42 = arith.addf %41, %40 : vector<8x128xf32>
    %43 = arith.subf %42, %24 : vector<8x128xf32>
    %44 = arith.divf %38, %43 : vector<8x128xf32>
    %cst_12 = arith.constant 1.000000e+00 : f32
    %45 = vector.broadcast %cst_12 : f32 to vector<8x128xf32>
    %46 = arith.subf %45, %44 : vector<8x128xf32>
    %47 = arith.subf %24, %6 : vector<8x128xf32>
    %c0_i32_13 = arith.constant 0 : i32
    %48 = vector.broadcast %c0_i32_13 : i32 to vector<8x128xi32>
    %49 = arith.cmpi eq, %32, %48 : vector<8x128xi32>
    %50 = vector.broadcast %36 : f32 to vector<8x128xf32>
    %51 = arith.subf %50, %47 : vector<8x128xf32>
    %52 = vector.broadcast %36 : f32 to vector<8x128xf32>
    %53 = arith.addf %52, %33 : vector<8x128xf32>
    %54 = arith.subf %53, %47 : vector<8x128xf32>
    %55 = arith.divf %51, %54 : vector<8x128xf32>
    %cst_14 = arith.constant 1.000000e+00 : f32
    %56 = vector.broadcast %cst_14 : f32 to vector<8x128xf32>
    %57 = arith.subf %56, %55 : vector<8x128xf32>
    %cst_15 = arith.constant 0.000000e+00 : f32
    %58 = vector.broadcast %cst_15 : f32 to vector<8x128xf32>
    %59 = arith.select %49, %58, %57 : vector<8x128xi1>, vector<8x128xf32>
    %60 = arith.subf %46, %59 : vector<8x128xf32>
    %cst_16 = arith.constant 0.000000e+00 : f32
    %61 = vector.broadcast %cst_16 : f32 to vector<8x128xf32>
    %62 = arith.maximumf %4, %61 : vector<8x128xf32>
    %63 = arith.mulf %62, %60 : vector<8x128xf32>
    %c0_17 = arith.constant 0 : index
    %c0_18 = arith.constant 0 : index
    %c0_19 = arith.constant 0 : index
    %64 = vector.load %arg5[%c0_17, %c0_18, %c0_19] : memref<1x1x128xf32, #tpu.memory_space<vmem>>, vector<1x1x128xf32>
    %65 = vector.shape_cast %64 : vector<1x1x128xf32> to vector<1x128xf32>
    %cst_20 = arith.constant dense<0.000000e+00> : vector<128xf32>
    %66 = vector.multi_reduction <add>, %63, %cst_20 [0] : vector<8x128xf32> to vector<128xf32>
    %67 = vector.shape_cast %66 : vector<128xf32> to vector<1x128xf32>
    %68 = arith.addf %65, %67 : vector<1x128xf32>
    %c0_21 = arith.constant 0 : index
    %c0_22 = arith.constant 0 : index
    %c0_23 = arith.constant 0 : index
    %69 = vector.load %arg5[%c0_21, %c0_22, %c0_23] : memref<1x1x128xf32, #tpu.memory_space<vmem>>, vector<1x1x128xf32>
    %70 = vector.shape_cast %69 : vector<1x1x128xf32> to vector<1x128xf32>
    %71 = vector.shape_cast %68 : vector<1x128xf32> to vector<1x1x128xf32>
    tpu.vector_store %arg5[%c0_21, %c0_22, %c0_23], %71 {strides = array<i32>} : memref<1x1x128xf32, #tpu.memory_space<vmem>>, vector<1x1x128xf32>,
    %72 = vector.shape_cast %6 : vector<8x128xf32> to vector<1x8x128xf32>
    %cst_24 = arith.constant dense<0.000000e+00> : vector<1xf32>
    %73 = vector.multi_reduction <add>, %72, %cst_24 [1, 2] : vector<1x8x128xf32> to vector<1xf32>
    %74 = vector.shape_cast %73 : vector<1xf32> to vector<1x1x1xf32>
    %75 = vector.extract %74[0, 0, 0] : f32 from vector<1x1x1xf32>
    %76 = vector.broadcast %75 : f32 to vector<1x1xf32>
    %77 = arith.addf %21, %76 : vector<1x1xf32>
    %c0_25 = arith.constant 0 : index
    %c0_26 = arith.constant 0 : index
    %78 = vector.load %arg6[%c0_25, %c0_26] : memref<1x1xf32, #tpu.memory_space<vmem>>, vector<1x1xf32>
    tpu.vector_store %arg6[%c0_25, %c0_26], %77 {strides = array<i32>} : memref<1x1xf32, #tpu.memory_space<vmem>>, vector<1x1xf32>,
    return
  }
  func.func @transform_0(%arg0: i32, %arg1: i32, %arg2: memref<2xi32, #tpu.memory_space<smem>>) -> (i32, i32, i32) {
    %c0_i32 = arith.constant 0 : i32
    %c0_i32_0 = arith.constant 0 : i32
    return %arg0, %arg1, %c0_i32 : i32, i32, i32
  }
  func.func @transform_1(%arg0: i32, %arg1: i32, %arg2: memref<2xi32, #tpu.memory_space<smem>>) -> (i32, i32, i32) {
    %c0_i32 = arith.constant 0 : i32
    %c0_i32_0 = arith.constant 0 : i32
    return %arg0, %arg1, %c0_i32 : i32, i32, i32
  }
  func.func @transform_2(%arg0: i32, %arg1: i32, %arg2: memref<2xi32, #tpu.memory_space<smem>>) -> (i32, i32, i32) {
    %c0_i32 = arith.constant 0 : i32
    %c0_i32_0 = arith.constant 0 : i32
    %c0_i32_1 = arith.constant 0 : i32
    return %arg0, %c0_i32, %c0_i32_0 : i32, i32, i32
  }
}

</mosaic_0001>

<llo_original>
// kernel: bce_lovasz_loss.2
$region0: #{bce_lovasz_loss.2}
  #allocation0 [shape = 'u32[]', space=smem, size = 0x4, offset = 0x4, fixed_abs, tag = 'smem constant byte address 0x4 - core index']
  #allocation1 [shape = 'u32[144,128]{1,0:T(1,128)}', space=vmem, size = 0x12000, scoped, tag = 'internal scratch']
  %s0 = inlined_call_operand.vmem [shape: f32[2,8,128], index: 0, kind: input, shape index: {}]
  %s1 = inlined_call_operand.vmem [shape: f32[2,8,128], index: 1, kind: input, shape index: {}]
  %s2 = inlined_call_operand.vmem [shape: f32[2,8,128], index: 2, kind: output, shape index: {0}]
  %s3 = inlined_call_operand.vmem [shape: f32[2,1,128], index: 3, kind: output, shape index: {1}]
  %s4 = inlined_call_operand.vmem [shape: f32[2,1,128], index: 4, kind: output, shape index: {2}]
  %5 = xla_tuple %s2, %s3, %s4
  %s6 = sld [smem:[#allocation0]]
  $region61: #{bce_lovasz_loss.2} parent=0
    _
  %s8 = ssub.s32 1, %s6
  %s9 = scalar_select 0, %s8, %s6
  loop: start=0, step=1, limit=4
  $region2: #{bce_lovasz_loss.2} parent=0 // loop_pre_header
    _
  $region3: #{bce_lovasz_loss.2} parent=0 // loop_header
    %s11 = sphi 0, %s15
    %p12 = scmp.ge.s32.totalorder %s11, 4
    %s18 = sphi 0, %s30
    %s19 = sphi 0, %s26
    %s20 = sphi 0, %s18
    %s21 = sphi 0, %s19
    %s22 = sphi 0, %s20
    %s23 = sphi 0, %s21
    %s35 = sphi 0, %s37
    %s38 = sphi 0, %s35
    %s39 = sphi 0, %s38
    %s55 = sphi 0, %s39
    %s63 = sphi 0, %s65
    %s66 = sphi 0, %s63
    %s67 = sphi 0, %s66
    %s83 = sphi 0, %s67
    %s91 = sphi 0, %s93
    %s94 = sphi 0, %s91
    %s95 = sphi 0, %s94
    %s111 = sphi 0, %s95
    %s117 = sphi 0, %s119
    %s120 = sphi 0, %s117
    %s121 = sphi 0, %s120
    %s137 = sphi 0, %s121
    %s143 = sphi 0, %s145
    %s146 = sphi 0, %s143
    %s147 = sphi 0, %s146
    %s163 = sphi 0, %s147
  $region4: #{bce_lovasz_loss.2} parent=0 // loop_header_branch
    %14 = sbr.rel (%p12) target = $region8
  $region5: #{bce_lovasz_loss.2} parent=0 // loop_body
    %s16 = ssub.s32 %s11, 1
    %s17 = ssub.s32 %s11, 2
    %s24 = sadd.s32 1, %s19
    %p25 = scmp.ge.s32.totalorder %s24, 1
    %s26 = scalar_select %p25, 0, %s24
    %s27 = sadd.s32 1, %s18
    %s28 = scalar_select %p25, %s27, %s18
    %p29 = scmp.ge.s32.totalorder %s28, 2
    %s30 = scalar_select %p29, 0, %s28
    %s31 = ssub.s32 %s18, %s30
    %s32 = ssub.s32 %s19, %s26
    %s33 = sor.u32 %s31, %s32
    %p34 = scmp.eq.s32.totalorder %s33, 0
    %s36 = sadd.s32 %s35, 1
    %s37 = scalar_select %p34, %s35, %s36
    %p40 = pneg %p34
    %p41 = scmp.eq.s32.totalorder %s11, 1
    %p42 = por %p40, %p41
    %p43 = scmp.ne.s32.totalorder %s35, %s38
    %p44 = scmp.eq.s32.totalorder %s11, 0
    %p45 = por %p43, %p44
    %p46 = scmp.ne.s32.totalorder %s35, %s38
    %p47 = scmp.eq.s32.totalorder %s16, 1
    %p48 = por %p46, %p47
    %p49 = scmp.ne.s32.totalorder %s38, %s39
    %p50 = scmp.eq.s32.totalorder %s16, 0
    %p51 = por %p49, %p50
    %p52 = scmp.ne.s32.totalorder %s38, %s39
    %p53 = scmp.eq.s32.totalorder %s17, 1
    %p54 = por %p52, %p53
    %p56 = scmp.ne.s32.totalorder %s39, %s55
    %p57 = scmp.eq.s32.totalorder %s17, 0
    %p58 = por %p56, %p57
    %s59 = ssub.s32 %s18, %s30
    %s60 = ssub.s32 %s19, %s26
    %s61 = sor.u32 %s59, %s60
    %p62 = scmp.eq.s32.totalorder %s61, 0
    %s64 = sadd.s32 %s63, 1
    %s65 = scalar_select %p62, %s63, %s64
    %p68 = pneg %p62
    %p69 = scmp.eq.s32.totalorder %s11, 1
    %p70 = por %p68, %p69
    %p71 = scmp.ne.s32.totalorder %s63, %s66
    %p72 = scmp.eq.s32.totalorder %s11, 0
    %p73 = por %p71, %p72
    %p74 = scmp.ne.s32.totalorder %s63, %s66
    %p75 = scmp.eq.s32.totalorder %s16, 1
    %p76 = por %p74, %p75
    %p77 = scmp.ne.s32.totalorder %s66, %s67
    %p78 = scmp.eq.s32.totalorder %s16, 0
    %p79 = por %p77, %p78
    %p80 = scmp.ne.s32.totalorder %s66, %s67
    %p81 = scmp.eq.s32.totalorder %s17, 1
    %p82 = por %p80, %p81
    %p84 = scmp.ne.s32.totalorder %s67, %s83
    %p85 = scmp.eq.s32.totalorder %s17, 0
    %p86 = por %p84, %p85
    %s87 = ssub.s32 %s18, %s30
    %s88 = ssub.s32 %s19, %s26
    %s89 = sor.u32 %s87, %s88
    %p90 = scmp.eq.s32.totalorder %s89, 0
    %s92 = sadd.s32 %s91, 1
    %s93 = scalar_select %p90, %s91, %s92
    %p96 = pneg %p90
    %p97 = scmp.eq.s32.totalorder %s11, 1
    %p98 = por %p96, %p97
    %p99 = scmp.ne.s32.totalorder %s91, %s94
    %p100 = scmp.eq.s32.totalorder %s11, 0
    %p101 = por %p99, %p100
    %p102 = scmp.ne.s32.totalorder %s91, %s94
    %p103 = scmp.eq.s32.totalorder %s16, 1
    %p104 = por %p102, %p103
    %p105 = scmp.ne.s32.totalorder %s94, %s95
    %p106 = scmp.eq.s32.totalorder %s16, 0
    %p107 = por %p105, %p106
    %p108 = scmp.ne.s32.totalorder %s94, %s95
    %p109 = scmp.eq.s32.totalorder %s17, 1
    %p110 = por %p108, %p109
    %p112 = scmp.ne.s32.totalorder %s95, %s111
    %p113 = scmp.eq.s32.totalorder %s17, 0
    %p114 = por %p112, %p113
    %s115 = ssub.s32 %s18, %s30
    %p116 = scmp.eq.s32.totalorder %s115, 0
    %s118 = sadd.s32 %s117, 1
    %s119 = scalar_select %p116, %s117, %s118
    %p122 = pneg %p116
    %p123 = scmp.eq.s32.totalorder %s11, 1
    %p124 = por %p122, %p123
    %p125 = scmp.ne.s32.totalorder %s117, %s120
    %p126 = scmp.eq.s32.totalorder %s11, 0
    %p127 = por %p125, %p126
    %p128 = scmp.ne.s32.totalorder %s117, %s120
    %p129 = scmp.eq.s32.totalorder %s16, 1
    %p130 = por %p128, %p129
    %p131 = scmp.ne.s32.totalorder %s120, %s121
    %p132 = scmp.eq.s32.totalorder %s16, 0
    %p133 = por %p131, %p132
    %p134 = scmp.ne.s32.totalorder %s120, %s121
    %p135 = scmp.eq.s32.totalorder %s17, 1
    %p136 = por %p134, %p135
    %p138 = scmp.ne.s32.totalorder %s121, %s137
    %p139 = scmp.eq.s32.totalorder %s17, 0
    %p140 = por %p138, %p139
    %s141 = ssub.s32 %s18, %s30
    %p142 = scmp.eq.s32.totalorder %s141, 0
    %s144 = sadd.s32 %s143, 1
    %s145 = scalar_select %p142, %s143, %s144
    %p148 = pneg %p142
    %p149 = scmp.eq.s32.totalorder %s11, 1
    %p150 = por %p148, %p149
    %p151 = scmp.ne.s32.totalorder %s143, %s146
    %p152 = scmp.eq.s32.totalorder %s11, 0
    %p153 = por %p151, %p152
    %p154 = scmp.ne.s32.totalorder %s143, %s146
    %p155 = scmp.eq.s32.totalorder %s16, 1
    %p156 = por %p154, %p155
    %p157 = scmp.ne.s32.totalorder %s146, %s147
    %p158 = scmp.eq.s32.totalorder %s16, 0
    %p159 = por %p157, %p158
    %p160 = scmp.ne.s32.totalorder %s146, %s147
    %p161 = scmp.eq.s32.totalorder %s17, 1
    %p162 = por %p160, %p161
    %p164 = scmp.ne.s32.totalorder %s147, %s163
    %p165 = scmp.eq.s32.totalorder %s17, 0
    %p166 = por %p164, %p165
    %p167 = scmp.le.s32.totalorder 1, %s11
    %p168 = scmp.lt.s32.totalorder %s11, 3
    %p169 = pnand %p167, %p168
    %p170 = pneg %p169
    // Predicated region
    $region9: #{bce_lovasz_loss.2} parent=5 // pred_check
      _
    $region10: #{bce_lovasz_loss.2} parent=5 // pred_check_branch
      %172 = sbr.rel (%p169) target = $region12
    $region11: #{bce_lovasz_loss.2} parent=5 // pred_region
      %s173 = ssub.s32 %s11, 1
    $region12: #{bce_lovasz_loss.2} parent=5 // pred_fallthru
      _
    %p174 = scmp.lt.s32.totalorder %s11, 2
    // Predicated region
    $region13: #{bce_lovasz_loss.2} parent=5 // pred_check
      %p175 = pneg %p174
    $region14: #{bce_lovasz_loss.2} parent=5 // pred_check_branch
      %177 = sbr.rel (%p175) target = $region16
    $region15: #{bce_lovasz_loss.2} parent=5 // pred_region
      // Predicated region
      $region17: #{bce_lovasz_loss.2} parent=15 // pred_check
        %p178 = pneg %p45
      $region18: #{bce_lovasz_loss.2} parent=15 // pred_check_branch
        %180 = sbr.rel (%p178) target = $region20
      $region19: #{bce_lovasz_loss.2} parent=15 // pred_region
        %p181 = scmp.lt.s32.totalorder %s18, 1
        %s182 = scalar_select %p181, %s18, 1
        %p183 = scmp.lt.s32.totalorder %s19, 0
        %s184 = scalar_select %p183, %s19, 0
        %s185 = sadd.s32 %s184, %s182
        %s186 = smul.addr %s185, 8
        %s187 = scalar_lea.vmem %s0, %s186
      $region20: #{bce_lovasz_loss.2} parent=15 // pred_fallthru
        _
      // Predicated region
      $region21: #{bce_lovasz_loss.2} parent=15 // pred_check
        %p188 = pneg %p73
      $region22: #{bce_lovasz_loss.2} parent=15 // pred_check_branch
        %190 = sbr.rel (%p188) target = $region24
      $region23: #{bce_lovasz_loss.2} parent=15 // pred_region
        %p191 = scmp.lt.s32.totalorder %s18, 1
        %s192 = scalar_select %p191, %s18, 1
        %p193 = scmp.lt.s32.totalorder %s19, 0
        %s194 = scalar_select %p193, %s19, 0
        %s195 = sadd.s32 %s194, %s192
        %s196 = smul.addr %s195, 8
        %s197 = scalar_lea.vmem %s1, %s196
      $region24: #{bce_lovasz_loss.2} parent=15 // pred_fallthru
        _
    $region16: #{bce_lovasz_loss.2} parent=5 // pred_fallthru
      _
    %p198 = scmp.le.s32.totalorder 1, %s11
    %p199 = scmp.lt.s32.totalorder %s11, 3
    %p200 = pnand %p198, %p199
    %p201 = pneg %p200
    // Predicated region
    $region25: #{bce_lovasz_loss.2} parent=5 // pred_check
      _
    $region26: #{bce_lovasz_loss.2} parent=5 // pred_check_branch
      %203 = sbr.rel (%p200) target = $region28
    $region27: #{bce_lovasz_loss.2} parent=5 // pred_region
      %s204 = ssub.s32 %s11, 1
      %p205 = scmp.lt.s32.totalorder %s20, 1
      %s206 = scalar_select %p205, %s20, 1
      %p207 = scmp.lt.s32.totalorder %s21, 0
      %s208 = scalar_select %p207, %s21, 0
      %s209 = sadd.s32 %s208, %s206
      %s210 = smul.addr %s209, 8
      %s211 = scalar_lea.vmem %s0, %s210
      %p212 = pneg %p51
      %p213 = pneg %p48
      %p214 = scmp.lt.s32.totalorder %s20, 1
      %s215 = scalar_select %p214, %s20, 1
      %p216 = scmp.lt.s32.totalorder %s21, 0
      %s217 = scalar_select %p216, %s21, 0
      %s218 = sadd.s32 %s217, %s215
      %s219 = smul.addr %s218, 8
      %s220 = scalar_lea.vmem %s1, %s219
      %p221 = pneg %p79
      %p222 = pneg %p76
      %p223 = pneg %p107
      %p224 = pneg %p104
      %p225 = scmp.lt.s32.totalorder %s20, 1
      %s226 = scalar_select %p225, %s20, 1
      %p227 = scmp.lt.s32.totalorder %s21, 0
      %s228 = scalar_select %p227, %s21, 0
      %s229 = sadd.s32 %s228, %s226
      %s230 = smul.addr %s229, 8
      %s231 = scalar_lea.vmem %s2, %s230
      %p232 = pneg %p133
      %p233 = pneg %p130
      %p234 = scmp.lt.s32.totalorder %s20, 1
      %s235 = scalar_select %p234, %s20, 1
      %s236 = scalar_lea.vmem %s3, %s235
      %p237 = pneg %p159
      %p238 = pneg %p156
      %p239 = scmp.lt.s32.totalorder %s20, 1
      %s240 = scalar_select %p239, %s20, 1
      %s241 = scalar_lea.vmem %s4, %s240
      %p242 = scmp.lt.s32.totalorder %s20, 1
      %s243 = scalar_select %p242, %s20, 1
      %p244 = scmp.lt.s32.totalorder %s21, 0
      %s245 = scalar_select %p244, %s21, 0
      %s246 = sadd.s32 %s245, %s243
      %s247 = smul.addr %s246, 8
      %s248 = scalar_lea.vmem %s0, %s247
      %p249 = scmp.lt.s32.totalorder %s20, 1
      %s250 = scalar_select %p249, %s20, 1
      %p251 = scmp.lt.s32.totalorder %s21, 0
      %s252 = scalar_select %p251, %s21, 0
      %s253 = sadd.s32 %s252, %s250
      %s254 = smul.addr %s253, 8
      %s255 = scalar_lea.vmem %s1, %s254
      %p256 = scmp.lt.s32.totalorder %s20, 1
      %s257 = scalar_select %p256, %s20, 1
      %p258 = scmp.lt.s32.totalorder %s21, 0
      %s259 = scalar_select %p258, %s21, 0
      %s260 = sadd.s32 %s259, %s257
      %s261 = smul.addr %s260, 8
      %s262 = scalar_lea.vmem %s2, %s261
      %p263 = scmp.lt.s32.totalorder %s20, 1
      %s264 = scalar_select %p263, %s20, 1
      %s265 = scalar_lea.vmem %s3, %s264
      %p266 = scmp.lt.s32.totalorder %s20, 1
      %s267 = scalar_select %p266, %s20, 1
      %s268 = scalar_lea.vmem %s4, %s267
      %p269 = scmp.eq.s32.totalorder %s21, 0
      // Predicated region
      $region29: #{bce_lovasz_loss.2} parent=27 // pred_check
        %p270 = pneg %p269
      $region30: #{bce_lovasz_loss.2} parent=27 // pred_check_branch
        %272 = sbr.rel (%p270) target = $region32
      $region31: #{bce_lovasz_loss.2} parent=27 // pred_region
        %273 = vst [vmem:[%s265] sm:$0x1] 0.0
        %274 = vst [vmem:[%s268] sm:$0x1] 0.0
      $region32: #{bce_lovasz_loss.2} parent=27 // pred_fallthru
        _
      %v275 = vld [vmem:[%s248] sm:$0xff]
      %v276 = vld [vmem:[%s255] sm:$0xff]
      %v277 = vmul.f32 %v276, 2.0
      %v278 = vsub.f32 %v277, 1.0
      %v279 = vmul.f32 %v275, %v278
      %v280 = vsub.f32 1.0, %v279
      %281 = vst [vmem:[%s262] sm:$0xff] %v280
      %v282 = vmax.f32 %v275, 0.0
      %v283 = vmul.f32 %v275, %v276
      %v284 = vsub.f32 %v282, %v283
      %v285 = vand.u32 2147483647, %v275
      %v286 = vsub.f32 0.0, %v285
      %v287 = vmul.f32 %v286, 1.442695
      %v288 = vpow.pop %v287
      %v289 = vadd.f32 %v288, 1.0
      %v290 = vlog2.pop %v289
      %v291 = vmul.f32 %v290, 0.6931472
      %v292 = vadd.f32 %v284, %v291
      %v293 = vld [vmem:[%s265] sm:$0x1]
      %v294 = vrot.slane %v292, 4
      %v295 = vadd.f32 %v292, %v294
      %v296 = vrot.slane %v295, 2
      %v297 = vadd.f32 %v295, %v296
      %v298 = vrot.slane %v297, 1
      %v299 = vadd.f32 %v297, %v298
      %v300 = vadd.f32 %v293, %v299
      %301 = vst [vmem:[%s265] sm:$0x1] %v300
      %v302 = vld [vmem:[%s268] sm:$0x1]
      %v303 = vrot.slane %v276, 4
      %v304 = vadd.f32 %v276, %v303
      %v305 = vrot.slane %v304, 2
      %v306 = vadd.f32 %v304, %v305
      %v307 = vrot.slane %v306, 1
      %v308 = vadd.f32 %v306, %v307
      %v309 = vadd.f32 %v302, %v308
      %310 = vst [vmem:[%s268] sm:$0x1] %v309
      %p311 = scmp.lt.s32.totalorder %s20, 1
      %s312 = scalar_select %p311, %s20, 1
      %p313 = scmp.lt.s32.totalorder %s21, 0
      %s314 = scalar_select %p313, %s21, 0
      %s315 = sadd.s32 %s314, %s312
      %s316 = smul.addr %s315, 8
      %s317 = scalar_lea.vmem %s2, %s316
      %p318 = scmp.lt.s32.totalorder %s20, 1
      %s319 = scalar_select %p318, %s20, 1
      %s320 = scalar_lea.vmem %s3, %s319
      %p321 = scmp.lt.s32.totalorder %s20, 1
      %s322 = scalar_select %p321, %s20, 1
      %s323 = scalar_lea.vmem %s4, %s322
      // Predicated region
      $region33: #{bce_lovasz_loss.2} parent=27 // pred_check
        %p324 = pneg %p104
      $region34: #{bce_lovasz_loss.2} parent=27 // pred_check_branch
        %326 = sbr.rel (%p324) target = $region36
      $region35: #{bce_lovasz_loss.2} parent=27 // pred_region
        _
      $region36: #{bce_lovasz_loss.2} parent=27 // pred_fallthru
        _
      // Predicated region
      $region37: #{bce_lovasz_loss.2} parent=27 // pred_check
        %p327 = pneg %p130
      $region38: #{bce_lovasz_loss.2} parent=27 // pred_check_branch
        %329 = sbr.rel (%p327) target = $region40
      $region39: #{bce_lovasz_loss.2} parent=27 // pred_region
        _
      $region40: #{bce_lovasz_loss.2} parent=27 // pred_fallthru
        _
      // Predicated region
      $region41: #{bce_lovasz_loss.2} parent=27 // pred_check
        %p330 = pneg %p156
      $region42: #{bce_lovasz_loss.2} parent=27 // pred_check_branch
        %332 = sbr.rel (%p330) target = $region44
      $region43: #{bce_lovasz_loss.2} parent=27 // pred_region
        _
      $region44: #{bce_lovasz_loss.2} parent=27 // pred_fallthru
        _
    $region28: #{bce_lovasz_loss.2} parent=5 // pred_fallthru
      _
    %p333 = scmp.le.s32.totalorder 2, %s11
    // Predicated region
    $region45: #{bce_lovasz_loss.2} parent=5 // pred_check
      %p334 = pneg %p333
    $region46: #{bce_lovasz_loss.2} parent=5 // pred_check_branch
      %336 = sbr.rel (%p334) target = $region48
    $region47: #{bce_lovasz_loss.2} parent=5 // pred_region
      %s337 = ssub.s32 %s11, 2
      // Predicated region
      $region49: #{bce_lovasz_loss.2} parent=47 // pred_check
        %p338 = pneg %p110
      $region50: #{bce_lovasz_loss.2} parent=47 // pred_check_branch
        %340 = sbr.rel (%p338) target = $region52
      $region51: #{bce_lovasz_loss.2} parent=47 // pred_region
        %p341 = scmp.lt.s32.totalorder %s22, 1
        %s342 = scalar_select %p341, %s22, 1
        %p343 = scmp.lt.s32.totalorder %s23, 0
        %s344 = scalar_select %p343, %s23, 0
        %s345 = sadd.s32 %s344, %s342
        %s346 = smul.addr %s345, 8
        %s347 = scalar_lea.vmem %s2, %s346
      $region52: #{bce_lovasz_loss.2} parent=47 // pred_fallthru
        _
      // Predicated region
      $region53: #{bce_lovasz_loss.2} parent=47 // pred_check
        %p348 = pneg %p136
      $region54: #{bce_lovasz_loss.2} parent=47 // pred_check_branch
        %350 = sbr.rel (%p348) target = $region56
      $region55: #{bce_lovasz_loss.2} parent=47 // pred_region
        %p351 = scmp.lt.s32.totalorder %s22, 1
        %s352 = scalar_select %p351, %s22, 1
        %s353 = scalar_lea.vmem %s3, %s352
      $region56: #{bce_lovasz_loss.2} parent=47 // pred_fallthru
        _
      // Predicated region
      $region57: #{bce_lovasz_loss.2} parent=47 // pred_check
        %p354 = pneg %p162
      $region58: #{bce_lovasz_loss.2} parent=47 // pred_check_branch
        %356 = sbr.rel (%p354) target = $region60
      $region59: #{bce_lovasz_loss.2} parent=47 // pred_region
        %p357 = scmp.lt.s32.totalorder %s22, 1
        %s358 = scalar_select %p357, %s22, 1
        %s359 = scalar_lea.vmem %s4, %s358
      $region60: #{bce_lovasz_loss.2} parent=47 // pred_fallthru
        _
    $region48: #{bce_lovasz_loss.2} parent=5 // pred_fallthru
      _
  $region6: #{bce_lovasz_loss.2} parent=0 // loop_footer
    %s15 = sadd.s32 1, %s11
  $region7: #{bce_lovasz_loss.2} parent=0 // loop_footer_branch
    %10 = sbr.rel target = $region3
  $region8: #{bce_lovasz_loss.2} parent=0 // loop_exit
    _

// kernel: bce_lovasz_loss.3
$region0: #{bce_lovasz_loss.3}
  #allocation0 [shape = 'u32[]', space=smem, size = 0x4, offset = 0x4, fixed_abs, tag = 'smem constant byte address 0x4 - core index']
  #allocation1 [shape = 'u32[144,128]{1,0:T(1,128)}', space=vmem, size = 0x12000, scoped, tag = 'internal scratch']
  #allocation2 [shape = 'f32[1,1]{1,0:T(1,128)}', space=vmem, size = 0x200, scoped, tag = 'scratch operand']
  #allocation3 [shape = 's32[1]{0}', space=sflag, size = 0x4, scoped, tag = 'scoped memory for bce_lovasz_loss.3']
  #allocation4 [shape = 'u8[512]{0}', space=smem, size = 0x200, scoped, tag = 'prefetched SMEM operand 0']
  %s0 = inlined_call_operand.vmem [shape: s32[2], index: 0, kind: input, shape index: {}]
  %s1 = inlined_call_operand.vmem [shape: f32[2,8,128], index: 1, kind: input, shape index: {}]
  %s2 = inlined_call_operand.vmem [shape: f32[2,8,128], index: 2, kind: input, shape index: {}]
  %s3 = inlined_call_operand.vmem [shape: f32[2,1,128], index: 3, kind: output, shape index: {}]
  %s4 = sld [smem:[#allocation0]]
  $region45: #{bce_lovasz_loss.3} parent=0
    _
  %s6 = ssub.s32 1, %s4
  %s7 = scalar_select 0, %s6, %s4
  %s8 = sshll.u32 %s0, 4
  %s9 = int_to_ptr.vmem [resolvable:$true] %s8
  %11 = dma.vmem_to_smem %s9, 16, [#allocation4], [#allocation3]
  %12 = dma.done [#allocation3], 16
  %13 = sfence
  loop: start=0, step=1, limit=4
  $region2: #{bce_lovasz_loss.3} parent=0 // loop_pre_header
    _
  $region3: #{bce_lovasz_loss.3} parent=0 // loop_header
    %s15 = sphi 0, %s19
    %p16 = scmp.ge.s32.totalorder %s15, 4
    %s22 = sphi 0, %s34
    %s23 = sphi 0, %s30
    %s24 = sphi 0, %s22
    %s25 = sphi 0, %s23
    %s26 = sphi 0, %s24
    %s27 = sphi 0, %s25
    %s39 = sphi 0, %s41
    %s42 = sphi 0, %s39
    %s43 = sphi 0, %s42
    %s59 = sphi 0, %s43
    %s67 = sphi 0, %s69
    %s70 = sphi 0, %s67
    %s71 = sphi 0, %s70
    %s87 = sphi 0, %s71
    %s93 = sphi 0, %s95
    %s96 = sphi 0, %s93
    %s97 = sphi 0, %s96
    %s113 = sphi 0, %s97
  $region4: #{bce_lovasz_loss.3} parent=0 // loop_header_branch
    %18 = sbr.rel (%p16) target = $region8
  $region5: #{bce_lovasz_loss.3} parent=0 // loop_body
    %s20 = ssub.s32 %s15, 1
    %s21 = ssub.s32 %s15, 2
    %s28 = sadd.s32 1, %s23
    %p29 = scmp.ge.s32.totalorder %s28, 1
    %s30 = scalar_select %p29, 0, %s28
    %s31 = sadd.s32 1, %s22
    %s32 = scalar_select %p29, %s31, %s22
    %p33 = scmp.ge.s32.totalorder %s32, 2
    %s34 = scalar_select %p33, 0, %s32
    %s35 = ssub.s32 %s22, %s34
    %s36 = ssub.s32 %s23, %s30
    %s37 = sor.u32 %s35, %s36
    %p38 = scmp.eq.s32.totalorder %s37, 0
    %s40 = sadd.s32 %s39, 1
    %s41 = scalar_select %p38, %s39, %s40
    %p44 = pneg %p38
    %p45 = scmp.eq.s32.totalorder %s15, 1
    %p46 = por %p44, %p45
    %p47 = scmp.ne.s32.totalorder %s39, %s42
    %p48 = scmp.eq.s32.totalorder %s15, 0
    %p49 = por %p47, %p48
    %p50 = scmp.ne.s32.totalorder %s39, %s42
    %p51 = scmp.eq.s32.totalorder %s20, 1
    %p52 = por %p50, %p51
    %p53 = scmp.ne.s32.totalorder %s42, %s43
    %p54 = scmp.eq.s32.totalorder %s20, 0
    %p55 = por %p53, %p54
    %p56 = scmp.ne.s32.totalorder %s42, %s43
    %p57 = scmp.eq.s32.totalorder %s21, 1
    %p58 = por %p56, %p57
    %p60 = scmp.ne.s32.totalorder %s43, %s59
    %p61 = scmp.eq.s32.totalorder %s21, 0
    %p62 = por %p60, %p61
    %s63 = ssub.s32 %s22, %s34
    %s64 = ssub.s32 %s23, %s30
    %s65 = sor.u32 %s63, %s64
    %p66 = scmp.eq.s32.totalorder %s65, 0
    %s68 = sadd.s32 %s67, 1
    %s69 = scalar_select %p66, %s67, %s68
    %p72 = pneg %p66
    %p73 = scmp.eq.s32.totalorder %s15, 1
    %p74 = por %p72, %p73
    %p75 = scmp.ne.s32.totalorder %s67, %s70
    %p76 = scmp.eq.s32.totalorder %s15, 0
    %p77 = por %p75, %p76
    %p78 = scmp.ne.s32.totalorder %s67, %s70
    %p79 = scmp.eq.s32.totalorder %s20, 1
    %p80 = por %p78, %p79
    %p81 = scmp.ne.s32.totalorder %s70, %s71
    %p82 = scmp.eq.s32.totalorder %s20, 0
    %p83 = por %p81, %p82
    %p84 = scmp.ne.s32.totalorder %s70, %s71
    %p85 = scmp.eq.s32.totalorder %s21, 1
    %p86 = por %p84, %p85
    %p88 = scmp.ne.s32.totalorder %s71, %s87
    %p89 = scmp.eq.s32.totalorder %s21, 0
    %p90 = por %p88, %p89
    %s91 = ssub.s32 %s22, %s34
    %p92 = scmp.eq.s32.totalorder %s91, 0
    %s94 = sadd.s32 %s93, 1
    %s95 = scalar_select %p92, %s93, %s94
    %p98 = pneg %p92
    %p99 = scmp.eq.s32.totalorder %s15, 1
    %p100 = por %p98, %p99
    %p101 = scmp.ne.s32.totalorder %s93, %s96
    %p102 = scmp.eq.s32.totalorder %s15, 0
    %p103 = por %p101, %p102
    %p104 = scmp.ne.s32.totalorder %s93, %s96
    %p105 = scmp.eq.s32.totalorder %s20, 1
    %p106 = por %p104, %p105
    %p107 = scmp.ne.s32.totalorder %s96, %s97
    %p108 = scmp.eq.s32.totalorder %s20, 0
    %p109 = por %p107, %p108
    %p110 = scmp.ne.s32.totalorder %s96, %s97
    %p111 = scmp.eq.s32.totalorder %s21, 1
    %p112 = por %p110, %p111
    %p114 = scmp.ne.s32.totalorder %s97, %s113
    %p115 = scmp.eq.s32.totalorder %s21, 0
    %p116 = por %p114, %p115
    %p117 = scmp.le.s32.totalorder 1, %s15
    %p118 = scmp.lt.s32.totalorder %s15, 3
    %p119 = pnand %p117, %p118
    %p120 = pneg %p119
    // Predicated region
    $region9: #{bce_lovasz_loss.3} parent=5 // pred_check
      _
    $region10: #{bce_lovasz_loss.3} parent=5 // pred_check_branch
      %122 = sbr.rel (%p119) target = $region12
    $region11: #{bce_lovasz_loss.3} parent=5 // pred_region
      %s123 = ssub.s32 %s15, 1
    $region12: #{bce_lovasz_loss.3} parent=5 // pred_fallthru
      _
    %p124 = scmp.lt.s32.totalorder %s15, 2
    // Predicated region
    $region13: #{bce_lovasz_loss.3} parent=5 // pred_check
      %p125 = pneg %p124
    $region14: #{bce_lovasz_loss.3} parent=5 // pred_check_branch
      %127 = sbr.rel (%p125) target = $region16
    $region15: #{bce_lovasz_loss.3} parent=5 // pred_region
      // Predicated region
      $region17: #{bce_lovasz_loss.3} parent=15 // pred_check
        %p128 = pneg %p49
      $region18: #{bce_lovasz_loss.3} parent=15 // pred_check_branch
        %130 = sbr.rel (%p128) target = $region20
      $region19: #{bce_lovasz_loss.3} parent=15 // pred_region
        %p131 = scmp.lt.s32.totalorder %s22, 1
        %s132 = scalar_select %p131, %s22, 1
        %p133 = scmp.lt.s32.totalorder %s23, 0
        %s134 = scalar_select %p133, %s23, 0
        %s135 = sadd.s32 %s134, %s132
        %s136 = smul.addr %s135, 8
        %s137 = scalar_lea.vmem %s1, %s136
      $region20: #{bce_lovasz_loss.3} parent=15 // pred_fallthru
        _
      // Predicated region
      $region21: #{bce_lovasz_loss.3} parent=15 // pred_check
        %p138 = pneg %p77
      $region22: #{bce_lovasz_loss.3} parent=15 // pred_check_branch
        %140 = sbr.rel (%p138) target = $region24
      $region23: #{bce_lovasz_loss.3} parent=15 // pred_region
        %p141 = scmp.lt.s32.totalorder %s22, 1
        %s142 = scalar_select %p141, %s22, 1
        %p143 = scmp.lt.s32.totalorder %s23, 0
        %s144 = scalar_select %p143, %s23, 0
        %s145 = sadd.s32 %s144, %s142
        %s146 = smul.addr %s145, 8
        %s147 = scalar_lea.vmem %s2, %s146
      $region24: #{bce_lovasz_loss.3} parent=15 // pred_fallthru
        _
    $region16: #{bce_lovasz_loss.3} parent=5 // pred_fallthru
      _
    %p148 = scmp.le.s32.totalorder 1, %s15
    %p149 = scmp.lt.s32.totalorder %s15, 3
    %p150 = pnand %p148, %p149
    %p151 = pneg %p150
    // Predicated region
    $region25: #{bce_lovasz_loss.3} parent=5 // pred_check
      _
    $region26: #{bce_lovasz_loss.3} parent=5 // pred_check_branch
      %153 = sbr.rel (%p150) target = $region28
    $region27: #{bce_lovasz_loss.3} parent=5 // pred_region
      %s154 = ssub.s32 %s15, 1
      %p155 = scmp.lt.s32.totalorder %s24, 1
      %s156 = scalar_select %p155, %s24, 1
      %p157 = scmp.lt.s32.totalorder %s25, 0
      %s158 = scalar_select %p157, %s25, 0
      %s159 = sadd.s32 %s158, %s156
      %s160 = smul.addr %s159, 8
      %s161 = scalar_lea.vmem %s1, %s160
      %p162 = pneg %p55
      %p163 = pneg %p52
      %p164 = scmp.lt.s32.totalorder %s24, 1
      %s165 = scalar_select %p164, %s24, 1
      %p166 = scmp.lt.s32.totalorder %s25, 0
      %s167 = scalar_select %p166, %s25, 0
      %s168 = sadd.s32 %s167, %s165
      %s169 = smul.addr %s168, 8
      %s170 = scalar_lea.vmem %s2, %s169
      %p171 = pneg %p83
      %p172 = pneg %p80
      %p173 = pneg %p109
      %p174 = pneg %p106
      %p175 = scmp.lt.s32.totalorder %s24, 1
      %s176 = scalar_select %p175, %s24, 1
      %s177 = scalar_lea.vmem %s3, %s176
      %p178 = scmp.lt.s32.totalorder %s24, 1
      %s179 = scalar_select %p178, %s24, 1
      %p180 = scmp.lt.s32.totalorder %s25, 0
      %s181 = scalar_select %p180, %s25, 0
      %s182 = sadd.s32 %s181, %s179
      %s183 = smul.addr %s182, 8
      %s184 = scalar_lea.vmem %s1, %s183
      %p185 = scmp.lt.s32.totalorder %s24, 1
      %s186 = scalar_select %p185, %s24, 1
      %p187 = scmp.lt.s32.totalorder %s25, 0
      %s188 = scalar_select %p187, %s25, 0
      %s189 = sadd.s32 %s188, %s186
      %s190 = smul.addr %s189, 8
      %s191 = scalar_lea.vmem %s2, %s190
      %p192 = scmp.lt.s32.totalorder %s24, 1
      %s193 = scalar_select %p192, %s24, 1
      %s194 = scalar_lea.vmem %s3, %s193
      %p195 = scmp.eq.s32.totalorder %s25, 0
      // Predicated region
      $region29: #{bce_lovasz_loss.3} parent=27 // pred_check
        %p196 = pneg %p195
      $region30: #{bce_lovasz_loss.3} parent=27 // pred_check_branch
        %198 = sbr.rel (%p196) target = $region32
      $region31: #{bce_lovasz_loss.3} parent=27 // pred_region
        %199 = vst [vmem:[%s194] sm:$0x1] 0.0
        %vm200 = vcmask 0
        %201 = vst.msk [vmem:[#allocation2] sm:$0x1] %vm200, 0.0
      $region32: #{bce_lovasz_loss.3} parent=27 // pred_fallthru
        _
      %v202 = vld [vmem:[%s184] sm:$0xff]
      %v203 = vld [vmem:[%s191] sm:$0xff]
      %v204 = vlaneseq
      %v205 = vshrl.u32 %v204, 7
      %v206 = vadd.s32 %v205, 8
      %v207 = vadd.s32 %v205, 16
      %v208 = vadd.s32 %v205, 24
      %v209 = vadd.s32 %v205, 32
      %v210 = vadd.s32 %v205, 40
      %v211 = vadd.s32 %v205, 48
      %v212 = vadd.s32 %v205, 56
      %v213 = vadd.s32 %v205, 64
      %v214 = vadd.s32 %v205, 72
      %v215 = vadd.s32 %v205, 80
      %v216 = vadd.s32 %v205, 88
      %v217 = vadd.s32 %v205, 96
      %v218 = vadd.s32 %v205, 104
      %v219 = vadd.s32 %v205, 112
      %v220 = vadd.s32 %v205, 120
      %v221 = vlaneseq
      %v222 = vand.u32 %v221, 127
      %vm223 = vcmp.le.s32.totalorder %v205, %v222
      %vm224 = vcmp.le.s32.totalorder %v206, %v222
      %vm225 = vcmp.le.s32.totalorder %v207, %v222
      %vm226 = vcmp.le.s32.totalorder %v208, %v222
      %vm227 = vcmp.le.s32.totalorder %v209, %v222
      %vm228 = vcmp.le.s32.totalorder %v210, %v222
      %vm229 = vcmp.le.s32.totalorder %v211, %v222
      %vm230 = vcmp.le.s32.totalorder %v212, %v222
      %vm231 = vcmp.le.s32.totalorder %v213, %v222
      %vm232 = vcmp.le.s32.totalorder %v214, %v222
      %vm233 = vcmp.le.s32.totalorder %v215, %v222
      %vm234 = vcmp.le.s32.totalorder %v216, %v222
      %vm235 = vcmp.le.s32.totalorder %v217, %v222
      %vm236 = vcmp.le.s32.totalorder %v218, %v222
      %vm237 = vcmp.le.s32.totalorder %v219, %v222
      %vm238 = vcmp.le.s32.totalorder %v220, %v222
      %v239 = vsel %vm223, 1, 0
      %v240 = vsel %vm224, 1, 0
      %v241 = vsel %vm225, 1, 0
      %v242 = vsel %vm226, 1, 0
      %v243 = vsel %vm227, 1, 0
      %v244 = vsel %vm228, 1, 0
      %v245 = vsel %vm229, 1, 0
      %v246 = vsel %vm230, 1, 0
      %v247 = vsel %vm231, 1, 0
      %v248 = vsel %vm232, 1, 0
      %v249 = vsel %vm233, 1, 0
      %v250 = vsel %vm234, 1, 0
      %v251 = vsel %vm235, 1, 0
      %v252 = vsel %vm236, 1, 0
      %v253 = vsel %vm237, 1, 0
      %v254 = vsel %vm238, 1, 0
      %v255 = vcvt.s32.f32 %v239
      %v256 = vcvt.s32.f32 %v240
      %v257 = vcvt.s32.f32 %v241
      %v258 = vcvt.s32.f32 %v242
      %v259 = vcvt.s32.f32 %v243
      %v260 = vcvt.s32.f32 %v244
      %v261 = vcvt.s32.f32 %v245
      %v262 = vcvt.s32.f32 %v246
      %v263 = vcvt.s32.f32 %v247
      %v264 = vcvt.s32.f32 %v248
      %v265 = vcvt.s32.f32 %v249
      %v266 = vcvt.s32.f32 %v250
      %v267 = vcvt.s32.f32 %v251
      %v268 = vcvt.s32.f32 %v252
      %v269 = vcvt.s32.f32 %v253
      %v270 = vcvt.s32.f32 %v254
      %vm271 = vcmp.gt.s32.totalorder %v205, %v222
      %v272 = vsel %vm271, 1, 0
      %v273 = vcvt.s32.f32 %v272
      %274 = vmatprep.subr.mxu0 0.0
      %275 = vmatpush1.msra.mxu0 1.0
      %276 = vmatprep.subr.mxu0 0.0
      %277 = vmatpush1.msra.mxu0 1.0
      %278 = vmatprep.subr.mxu0 0.0
      %279 = vmatpush1.msra.mxu0 1.0
      %280 = vmatprep.subr.mxu0 0.0
      %281 = vmatpush1.msra.mxu0 1.0
      %282 = vmatprep.subr.mxu0 0.0
      %283 = vmatpush1.msra.mxu0 1.0
      %284 = vmatprep.subr.mxu0 0.0
      %285 = vmatpush1.msra.mxu0 1.0
      %286 = vmatprep.subr.mxu0 0.0
      %287 = vmatpush1.msra.mxu0 1.0
      %288 = vmatprep.subr.mxu0 0.0
      %289 = vmatpush1.msra.mxu0 1.0
      %290 = vmatprep.subr.mxu0 0.0
      %291 = vmatpush1.msra.mxu0 1.0
      %292 = vmatprep.subr.mxu0 0.0
      %293 = vmatpush1.msra.mxu0 1.0
      %294 = vmatprep.subr.mxu0 0.0
      %295 = vmatpush1.msra.mxu0 1.0
      %296 = vmatprep.subr.mxu0 0.0
      %297 = vmatpush1.msra.mxu0 1.0
      %298 = vmatprep.subr.mxu0 0.0
      %299 = vmatpush1.msra.mxu0 1.0
      %300 = vmatprep.subr.mxu0 0.0
      %301 = vmatpush1.msra.mxu0 1.0
      %302 = vmatprep.subr.mxu0 0.0
      %303 = vmatpush1.msra.mxu0 1.0
      %304 = vmatprep.subr.mxu0 0.0
      %305 = vmatpush1.msra.mxu0 1.0
      %306 = vmatprep.subr.mxu0 0.0
      %307 = vmatpush2.msra.mxu0 0.0
      %308 = vmatprep.subr.mxu0 0.0
      %309 = vmatpush2.msra.mxu0 0.0
      %310 = vmatprep.subr.mxu0 0.0
      %311 = vmatpush2.msra.mxu0 0.0
      %312 = vmatprep.subr.mxu0 0.0
      %313 = vmatpush2.msra.mxu0 0.0
      %314 = vmatprep.subr.mxu0 0.0
      %315 = vmatpush2.msra.mxu0 0.0
      %316 = vmatprep.subr.mxu0 0.0
      %317 = vmatpush2.msra.mxu0 0.0
      %318 = vmatprep.subr.mxu0 0.0
      %319 = vmatpush2.msra.mxu0 0.0
      %320 = vmatprep.subr.mxu0 0.0
      %321 = vmatpush2.msra.mxu0 0.0
      %322 = vmatprep.subr.mxu0 0.0
      %323 = vmatpush2.msra.mxu0 0.0
      %324 = vmatprep.subr.mxu0 0.0
      %325 = vmatpush2.msra.mxu0 0.0
      %326 = vmatprep.subr.mxu0 0.0
      %327 = vmatpush2.msra.mxu0 0.0
      %328 = vmatprep.subr.mxu0 0.0
      %329 = vmatpush2.msra.mxu0 0.0
      %330 = vmatprep.subr.mxu0 0.0
      %331 = vmatpush2.msra.mxu0 0.0
      %332 = vmatprep.subr.mxu0 0.0
      %333 = vmatpush2.msra.mxu0 0.0
      %334 = vmatprep.subr.mxu0 0.0
      %335 = vmatpush2.msra.mxu0 0.0
      %336 = vmatprep.subr.mxu0 0.0
      %337 = vmatpush2.msra.mxu0 0.0
      %338 = vmatprep.mubr.f32.mxu0 0.0
      %339 = vmatmul.mubr.f32.gmra.mxu0 %v203
      %v340 = vpop.f32.mrf.mxu0
      %v341 = vadd.f32 0.0, %v340
      %v342 = vpop.f32.mrf.mxu0
      %343 = vdwg.mxu0
      %vm344 = vcmask 64512
      %v346 = vsel %vm344, %v273, 0
      %348 = vmatprep.subr.mxu0 0.0
      %349 = vmatpush1.msra.mxu0 0.0
      %350 = vmatprep.subr.mxu0 0.0
      %351 = vmatpush1.msra.mxu0 0.0
      %352 = vmatprep.subr.mxu0 0.0
      %353 = vmatpush1.msra.mxu0 0.0
      %354 = vmatprep.subr.mxu0 0.0
      %355 = vmatpush1.msra.mxu0 0.0
      %356 = vmatprep.subr.mxu0 0.0
      %357 = vmatpush1.msra.mxu0 0.0
      %358 = vmatprep.subr.mxu0 0.0
      %359 = vmatpush1.msra.mxu0 0.0
      %360 = vmatprep.subr.mxu0 0.0
      %361 = vmatpush1.msra.mxu0 0.0
      %362 = vmatprep.subr.mxu0 0.0
      %363 = vmatpush1.msra.mxu0 0.0
      %364 = vmatprep.subr.mxu0 0.0
      %365 = vmatpush1.msra.mxu0 0.0
      %366 = vmatprep.subr.mxu0 0.0
      %367 = vmatpush1.msra.mxu0 0.0
      %368 = vmatprep.subr.mxu0 0.0
      %369 = vmatpush1.msra.mxu0 0.0
      %370 = vmatprep.subr.mxu0 0.0
      %371 = vmatpush1.msra.mxu0 0.0
      %372 = vmatprep.subr.mxu0 0.0
      %373 = vmatpush1.msra.mxu0 0.0
      %374 = vmatprep.subr.mxu0 0.0
      %375 = vmatpush1.msra.mxu0 0.0
      %376 = vmatprep.subr.mxu0 0.0
      %377 = vmatpush1.msra.mxu0 0.0
      %378 = vmatprep.subr.mxu0 0.0
      %379 = vmatpush1.msra.mxu0 %v341
      %380 = vmatprep.subr.mxu0 0.0
      %381 = vmatpush2.msra.mxu0 0.0
      %382 = vmatprep.subr.mxu0 0.0
      %383 = vmatpush2.msra.mxu0 0.0
      %384 = vmatprep.subr.mxu0 0.0
      %385 = vmatpush2.msra.mxu0 0.0
      %386 = vmatprep.subr.mxu0 0.0
      %387 = vmatpush2.msra.mxu0 0.0
      %388 = vmatprep.subr.mxu0 0.0
      %389 = vmatpush2.msra.mxu0 0.0
      %390 = vmatprep.subr.mxu0 0.0
      %391 = vmatpush2.msra.mxu0 0.0
      %392 = vmatprep.subr.mxu0 0.0
      %393 = vmatpush2.msra.mxu0 0.0
      %394 = vmatprep.subr.mxu0 0.0
      %395 = vmatpush2.msra.mxu0 0.0
      %396 = vmatprep.subr.mxu0 0.0
      %397 = vmatpush2.msra.mxu0 0.0
      %398 = vmatprep.subr.mxu0 0.0
      %399 = vmatpush2.msra.mxu0 0.0
      %400 = vmatprep.subr.mxu0 0.0
      %401 = vmatpush2.msra.mxu0 0.0
      %402 = vmatprep.subr.mxu0 0.0
      %403 = vmatpush2.msra.mxu0 0.0
      %404 = vmatprep.subr.mxu0 0.0
      %405 = vmatpush2.msra.mxu0 0.0
      %406 = vmatprep.subr.mxu0 0.0
      %407 = vmatpush2.msra.mxu0 0.0
      %408 = vmatprep.subr.mxu0 0.0
      %409 = vmatpush2.msra.mxu0 0.0
      %410 = vmatprep.subr.mxu0 0.0
      %411 = vmatpush2.msra.mxu0 0.0
      %412 = vmatprep.mubr.f32.mxu0 0.0
      %413 = vmatmul.mubr.f32.gmra.mxu0 %v346
      %v414 = vpop.f32.mrf.mxu0
      %v415 = vadd.f32 0.0, %v414
      %v416 = vpop.f32.mrf.mxu0
      %417 = vdwg.mxu0
      %v418 = vld [vmem:[#allocation2] sm:$0x1]
      %419 = vmatprep.subr.mxu0 0.0
      %420 = vmatpush1.msra.mxu0 %v270
      %421 = vmatprep.subr.mxu0 0.0
      %422 = vmatpush1.msra.mxu0 %v269
      %423 = vmatprep.subr.mxu0 0.0
      %424 = vmatpush1.msra.mxu0 %v268
      %425 = vmatprep.subr.mxu0 0.0
      %426 = vmatpush1.msra.mxu0 %v267
      %427 = vmatprep.subr.mxu0 0.0
      %428 = vmatpush1.msra.mxu0 %v266
      %429 = vmatprep.subr.mxu0 0.0
      %430 = vmatpush1.msra.mxu0 %v265
      %431 = vmatprep.subr.mxu0 0.0
      %432 = vmatpush1.msra.mxu0 %v264
      %433 = vmatprep.subr.mxu0 0.0
      %434 = vmatpush1.msra.mxu0 %v263
      %435 = vmatprep.subr.mxu0 0.0
      %436 = vmatpush1.msra.mxu0 %v262
      %437 = vmatprep.subr.mxu0 0.0
      %438 = vmatpush1.msra.mxu0 %v261
      %439 = vmatprep.subr.mxu0 0.0
      %440 = vmatpush1.msra.mxu0 %v260
      %441 = vmatprep.subr.mxu0 0.0
      %442 = vmatpush1.msra.mxu0 %v259
      %443 = vmatprep.subr.mxu0 0.0
      %444 = vmatpush1.msra.mxu0 %v258
      %445 = vmatprep.subr.mxu0 0.0
      %446 = vmatpush1.msra.mxu0 %v257
      %447 = vmatprep.subr.mxu0 0.0
      %448 = vmatpush1.msra.mxu0 %v256
      %449 = vmatprep.subr.mxu0 0.0
      %450 = vmatpush1.msra.mxu0 %v255
      %451 = vmatprep.subr.mxu0 0.0
      %452 = vmatpush2.msra.mxu0 0.0
      %453 = vmatprep.subr.mxu0 0.0
      %454 = vmatpush2.msra.mxu0 0.0
      %455 = vmatprep.subr.mxu0 0.0
      %456 = vmatpush2.msra.mxu0 0.0
      %457 = vmatprep.subr.mxu0 0.0
      %458 = vmatpush2.msra.mxu0 0.0
      %459 = vmatprep.subr.mxu0 0.0
      %460 = vmatpush2.msra.mxu0 0.0
      %461 = vmatprep.subr.mxu0 0.0
      %462 = vmatpush2.msra.mxu0 0.0
      %463 = vmatprep.subr.mxu0 0.0
      %464 = vmatpush2.msra.mxu0 0.0
      %465 = vmatprep.subr.mxu0 0.0
      %466 = vmatpush2.msra.mxu0 0.0
      %467 = vmatprep.subr.mxu0 0.0
      %468 = vmatpush2.msra.mxu0 0.0
      %469 = vmatprep.subr.mxu0 0.0
      %470 = vmatpush2.msra.mxu0 0.0
      %471 = vmatprep.subr.mxu0 0.0
      %472 = vmatpush2.msra.mxu0 0.0
      %473 = vmatprep.subr.mxu0 0.0
      %474 = vmatpush2.msra.mxu0 0.0
      %475 = vmatprep.subr.mxu0 0.0
      %476 = vmatpush2.msra.mxu0 0.0
      %477 = vmatprep.subr.mxu0 0.0
      %478 = vmatpush2.msra.mxu0 0.0
      %479 = vmatprep.subr.mxu0 0.0
      %480 = vmatpush2.msra.mxu0 0.0
      %481 = vmatprep.subr.mxu0 0.0
      %482 = vmatpush2.msra.mxu0 0.0
      %483 = vmatprep.mubr.f32.mxu0 0.0
      %484 = vmatmul.mubr.f32.gmra.mxu0 %v203
      %v485 = vpop.f32.mrf.mxu0
      %v486 = vadd.f32 %v415, %v485
      %v487 = vpop.f32.mrf.mxu0
      %488 = vdwg.mxu0
      %v490 = vlaneseq
      %v491 = vshrl.u32 %v490, 7
      %v492 = vsub.s32 0, %v491
      %v493 = vrot.slane %v418, %v492
      %494 = vset.pattern.permute.xlu0 0
      %495 = vperm.xlu0 %494, %v493
      %v496 = vpop.permute.xlu0 %495
      %v498 = vadd.f32 %v486, %v496
      %v499 = vmul.u32 %v205, 128
      %v500 = vadd.s32 %v499, %v222
      %s501 = smul.u32 %s25, 1024
      %v502 = vstv %s501
      %v503 = vadd.s32 %v500, %v502
      %v504 = vcvt.s32.f32 %v503
      %s505 = sld [smem:[#allocation4 + %s24]]
      %s506 = scvt.s32.f32 %s505
      %v507 = vstv %s506
      %v508 = vsub.f32 %v507, %v498
      %v509 = vadd.f32 %v504, 1.0
      %v510 = vadd.f32 %v507, %v509
      %v511 = vsub.f32 %v510, %v498
      %v512 = vrcp.pop %v511
      %v513 = vmul.f32 %v508, %v512
      %v514 = vsub.f32 1.0, %v513
      %v515 = vsub.f32 %v498, %v203
      %vm516 = vcmp.eq.s32.totalorder %v503, 0
      %v517 = vsub.f32 %v507, %v515
      %v518 = vadd.f32 %v507, %v504
      %v519 = vsub.f32 %v518, %v515
      %v520 = vrcp.pop %v519
      %v521 = vmul.f32 %v517, %v520
      %v522 = vsub.f32 1.0, %v521
      %v523 = vsel %vm516, 0.0, %v522
      %v524 = vsub.f32 %v514, %v523
      %v525 = vmax.f32 %v202, 0.0
      %v526 = vmul.f32 %v525, %v524
      %v527 = vld [vmem:[%s194] sm:$0x1]
      %v528 = vrot.slane %v526, 4
      %v529 = vadd.f32 %v526, %v528
      %v530 = vrot.slane %v529, 2
      %v531 = vadd.f32 %v529, %v530
      %v532 = vrot.slane %v531, 1
      %v533 = vadd.f32 %v531, %v532
      %v534 = vadd.f32 %v527, %v533
      %535 = vst [vmem:[%s194] sm:$0x1] %v534
      %536 = vadd.xlane.f32.xlu0 %v203
      %v537 = vpop.xlane.xlu0 %536
      %v538 = vrot.slane %v537, 4
      %v539 = vadd.f32 %v537, %v538
      %v540 = vrot.slane %v539, 2
      %v541 = vadd.f32 %v539, %v540
      %v542 = vrot.slane %v541, 1
      %v543 = vadd.f32 %v541, %v542
      %s544 = vtos %v543
      %v545 = vstv %s544
      %v546 = vadd.f32 %v418, %v545
      %vm547 = vcmask 0
      %548 = vst.msk [vmem:[#allocation2] sm:$0x1] %vm547, %v546
      %p549 = scmp.lt.s32.totalorder %s24, 1
      %s550 = scalar_select %p549, %s24, 1
      %s551 = scalar_lea.vmem %s3, %s550
      // Predicated region
      $region33: #{bce_lovasz_loss.3} parent=27 // pred_check
        %p552 = pneg %p106
      $region34: #{bce_lovasz_loss.3} parent=27 // pred_check_branch
        %554 = sbr.rel (%p552) target = $region36
      $region35: #{bce_lovasz_loss.3} parent=27 // pred_region
        _
      $region36: #{bce_lovasz_loss.3} parent=27 // pred_fallthru
        _
    $region28: #{bce_lovasz_loss.3} parent=5 // pred_fallthru
      _
    %p555 = scmp.le.s32.totalorder 2, %s15
    // Predicated region
    $region37: #{bce_lovasz_loss.3} parent=5 // pred_check
      %p556 = pneg %p555
    $region38: #{bce_lovasz_loss.3} parent=5 // pred_check_branch
      %558 = sbr.rel (%p556) target = $region40
    $region39: #{bce_lovasz_loss.3} parent=5 // pred_region
      %s559 = ssub.s32 %s15, 2
      // Predicated region
      $region41: #{bce_lovasz_loss.3} parent=39 // pred_check
        %p560 = pneg %p112
      $region42: #{bce_lovasz_loss.3} parent=39 // pred_check_branch
        %562 = sbr.rel (%p560) target = $region44
      $region43: #{bce_lovasz_loss.3} parent=39 // pred_region
        %p563 = scmp.lt.s32.totalorder %s26, 1
        %s564 = scalar_select %p563, %s26, 1
        %s565 = scalar_lea.vmem %s3, %s564
      $region44: #{bce_lovasz_loss.3} parent=39 // pred_fallthru
        _
    $region40: #{bce_lovasz_loss.3} parent=5 // pred_fallthru
      _
  $region6: #{bce_lovasz_loss.3} parent=0 // loop_footer
    %s19 = sadd.s32 1, %s15
  $region7: #{bce_lovasz_loss.3} parent=0 // loop_footer_branch
    %14 = sbr.rel target = $region3
  $region8: #{bce_lovasz_loss.3} parent=0 // loop_exit
    _

</llo_original>
